<compile_context>
chip_gen: v7x
topology: tpu7x:2x2x1
jax: 0.10.0
libtpu: 0.0.40
codegen_flags: <defaults>
</compile_context>

<pallas_src>
import jax
import jax.numpy as jnp
from jax.experimental import pallas as pl
from jax.experimental.pallas import tpu as pltpu


def _round_up(x, m):
    return ((x + m - 1) // m) * m


def _cdiv(a, b):
    return -(-a // b)


def planar_transform_kernel(scal_ref, w_ref, u_ref, z_ref,
                            z_new_ref, hprime_ref, det_ref):
    bias = scal_ref[0]             # scalar (SMEM)
    uw = scal_ref[1]               # loop-invariant dot(u, w) (SMEM)
    w = w_ref[...]                 # (1, dim)  VMEM-resident across grid steps
    u = u_ref[...]                 # (1, dim)  VMEM-resident across grid steps
    z = z_ref[...]                 # (bt, dim) current batch tile

    # inner_b = dot(w, z_b) + bias   (lane-axis reduce on the XLU, no MXU)
    inner = jnp.sum(z * w, axis=-1, keepdims=True) + bias    # (bt, 1)
    t = jnp.tanh(inner)                                      # (bt, 1)  EUP
    hprime = 1.0 - t * t                                     # (bt, 1)

    z_new_ref[...] = z + u * t                               # (bt, dim)
    hprime_ref[...] = hprime                                 # (bt, 1)
    det_ref[...] = 1.0 + hprime * uw                         # (bt, 1)


def _pick_block_rows(batch, dim, *, vmem_budget_bytes=12 << 20, max_rows=4096):
    # Per grid step VMEM holds ~2x(z in, double-buffered) + 2x(z_new out)
    # blocks of (bt, dim) f32, plus tiny (bt, 1) outputs.
    bytes_per_row = 4 * dim * 4
    bt = min(max_rows, max(8, vmem_budget_bytes // max(bytes_per_row, 1)))
    # On big batches keep >= ~4 grid steps (feeds v7x's two TensorCores via the
    # "parallel" axis) but never below 512 rows (amortize ~0.35us/step cost).
    if batch > 4 * 512:
        bt = min(bt, max(512, _round_up(_cdiv(batch, 4), 8)))
    bt = max(8, (bt // 8) * 8)
    if bt >= batch:
        return batch   # single block equal to the full array extent (any B ok)
    return bt


def planar_transform(w, u, bias, z, *, in_place=False):
    """Apply the planar flow step.

    w, u : (dim,) float32 parameters
    bias : (1,) or scalar float32 parameter
    z    : (dim,) or (B, dim) float32

    Returns (z_new, hprime, det):
      z_new  : same shape as z
      hprime : per-row 1 - tanh(inner)^2  (psi = hprime * w, reconstruct lazily)
      det    : per-row 1 + dot(u, psi);  log_det = log(|det|)
    """
    squeeze = (z.ndim == 1)
    if squeeze:
        z = z[None, :]
    z = z.astype(jnp.float32)
    B, dim = z.shape

    w32 = w.astype(jnp.float32)
    u32 = u.astype(jnp.float32)
    w2 = w32[None, :]                       # (1, dim)
    u2 = u32[None, :]                       # (1, dim)
    uw = jnp.dot(u32, w32)                  # loop-invariant scalar
    scalars = jnp.stack(
        [jnp.asarray(bias, jnp.float32).reshape(()), uw])    # (2,) -> SMEM

    bt = _pick_block_rows(B, dim)
    grid = (_cdiv(B, bt),)

    smem_spec = pl.BlockSpec(memory_space=pltpu.MemorySpace.SMEM)
    resident = pl.BlockSpec((1, dim), lambda i: (0, 0))       # stays in VMEM
    z_spec = pl.BlockSpec((bt, dim), lambda i: (i, 0))
    out_wide = pl.BlockSpec((bt, dim), lambda i: (i, 0))
    out_narrow = pl.BlockSpec((bt, 1), lambda i: (i, 0))

    aliases = {3: 0} if in_place else {}    # z (input 3) -> z_new (output 0)

    z_new, hprime, det = pl.pallas_call(
        planar_transform_kernel,
        grid=grid,
        in_specs=[smem_spec, resident, resident, z_spec],
        out_specs=(out_wide, out_narrow, out_narrow),
        out_shape=(
            jax.ShapeDtypeStruct((B, dim), jnp.float32),
            jax.ShapeDtypeStruct((B, 1), jnp.float32),
            jax.ShapeDtypeStruct((B, 1), jnp.float32),
        ),
        input_output_aliases=aliases,
        compiler_params=pltpu.CompilerParams(
            dimension_semantics=("parallel",)),
    )(scalars, w2, u2, z)

    hprime = hprime[:, 0]
    det = det[:, 0]
    if squeeze:
        z_new, hprime, det = z_new[0], hprime[0], det[0]
    return z_new, hprime, det


def psi_from_hprime(hprime, w):
    # psi = h'(inner) * w  (rank-1; reconstructed lazily instead of being
    # written out of the kernel as a full (B, dim) array).
    return jnp.asarray(hprime)[..., None] * w if jnp.ndim(hprime) else hprime * w


def log_det(det):
    # torch.log(torch.abs(1 + torch.dot(u, psi))) — det was fused in-kernel.
    return jnp.log(jnp.abs(det))


def parameter_init(key, low, high, size):
    # Mirrors: (low - high) * rand(size) + high  == uniform in (low, high)
    r = jax.random.uniform(key, (size,), dtype=jnp.float32)
    return (low - high) * r + high


if __name__ == "__main__":
    dim = 32
    batch = 16

    key = jax.random.PRNGKey(0)
    k_u, k_w, k_b, k_z1, k_zb = jax.random.split(key, 5)

    u = parameter_init(k_u, -0.01, 0.01, dim)
    w = parameter_init(k_w, -0.01, 0.01, dim)
    bias = parameter_init(k_b, -0.01, 0.01, 1)

    # --- 1-D case: exactly the PyTorch module's forward(z) ---
    z1 = jax.random.normal(k_z1, (dim,), dtype=jnp.float32)
    z_new1, hp1, det1 = planar_transform(w, u, bias, z1)
    psi1 = psi_from_hprime(hp1, w)
    ld1 = log_det(det1)

    # --- batched case: B independent vectors through the same flow step ---
    zb = jax.random.normal(k_zb, (batch, dim), dtype=jnp.float32)
    z_newb, hpb, detb = planar_transform(w, u, bias, zb)
    psib = psi_from_hprime(hpb, w)
    ldb = log_det(detb)

    jax.block_until_ready((z_new1, psi1, ld1, z_newb, psib, ldb))

    # Reference checks in plain JAX.
    inner1 = jnp.dot(w, z1) + bias[0]
    t1 = jnp.tanh(inner1)
    ref_znew1 = z1 + u * t1
    ref_psi1 = (1.0 - t1 ** 2) * w
    ref_ld1 = jnp.log(jnp.abs(1.0 + jnp.dot(u, ref_psi1)))
    assert jnp.allclose(z_new1, ref_znew1, atol=1e-6, rtol=1e-6)
    assert jnp.allclose(psi1, ref_psi1, atol=1e-6, rtol=1e-6)
    assert jnp.allclose(ld1, ref_ld1, atol=1e-5, rtol=1e-5)

    innerb = zb @ w + bias[0]                    # (B,)
    tb = jnp.tanh(innerb)[:, None]               # (B, 1)
    ref_znewb = zb + u[None, :] * tb
    ref_psib = (1.0 - tb ** 2) * w[None, :]
    ref_ldb = jnp.log(jnp.abs(1.0 + ref_psib @ u))
    assert jnp.allclose(z_newb, ref_znewb, atol=1e-6, rtol=1e-6)
    assert jnp.allclose(psib, ref_psib, atol=1e-6, rtol=1e-6)
    assert jnp.allclose(ldb, ref_ldb, atol=1e-5, rtol=1e-5)

    print("KERNEL_OK")
</pallas_src>

<mosaic_0001>
module attributes {stable_mosaic.version = 11 : i64} {
  func.func @planar_transform_kernel(%arg0: i32, %arg1: memref<2xf32, #tpu.memory_space<smem>>, %arg2: memref<1x32xf32, #tpu.memory_space<vmem>>, %arg3: memref<1x32xf32, #tpu.memory_space<vmem>>, %arg4: memref<1x32xf32, #tpu.memory_space<vmem>>, %arg5: memref<1x32xf32, #tpu.memory_space<vmem>>, %arg6: memref<1x1xf32, #tpu.memory_space<vmem>>, %arg7: memref<1x1xf32, #tpu.memory_space<vmem>>) attributes {dimension_semantics = [#tpu.dimension_semantics<parallel>], iteration_bounds = array<i64: 1>, scalar_prefetch = 0 : i64, scratch_operands = 0 : i64, tpu.core_type = #tpu.core_type<tc>, window_params = [{transform_indices = @transform_0, window_bounds = array<i64: 2>}, {pipeline_mode = #tpu.pipeline_mode<synchronous>, transform_indices = @transform_1, window_bounds = array<i64: 1, 32>}, {pipeline_mode = #tpu.pipeline_mode<synchronous>, transform_indices = @transform_2, window_bounds = array<i64: 1, 32>}, {transform_indices = @transform_3, window_bounds = array<i64: 1, 32>}, {transform_indices = @transform_4, window_bounds = array<i64: 1, 32>}, {transform_indices = @transform_5, window_bounds = array<i64: 1, 1>}, {transform_indices = @transform_6, window_bounds = array<i64: 1, 1>}]} {
    %c0 = arith.constant 0 : index
    %0 = memref.load %arg1[%c0] : memref<2xf32, #tpu.memory_space<smem>>
    %c1 = arith.constant 1 : index
    %1 = memref.load %arg1[%c1] : memref<2xf32, #tpu.memory_space<smem>>
    %c0_0 = arith.constant 0 : index
    %c0_1 = arith.constant 0 : index
    %2 = vector.load %arg2[%c0_0, %c0_1] : memref<1x32xf32, #tpu.memory_space<vmem>>, vector<1x32xf32>
    %c0_2 = arith.constant 0 : index
    %c0_3 = arith.constant 0 : index
    %3 = vector.load %arg3[%c0_2, %c0_3] : memref<1x32xf32, #tpu.memory_space<vmem>>, vector<1x32xf32>
    %c0_4 = arith.constant 0 : index
    %c0_5 = arith.constant 0 : index
    %4 = vector.load %arg4[%c0_4, %c0_5] : memref<1x32xf32, #tpu.memory_space<vmem>>, vector<1x32xf32>
    %5 = arith.mulf %4, %2 : vector<1x32xf32>
    %cst = arith.constant dense<0.000000e+00> : vector<1xf32>
    %6 = vector.multi_reduction <add>, %5, %cst [1] : vector<1x32xf32> to vector<1xf32>
    %7 = vector.shape_cast %6 : vector<1xf32> to vector<1x1xf32>
    %8 = vector.broadcast %0 : f32 to vector<1x1xf32>
    %9 = arith.addf %7, %8 : vector<1x1xf32>
    %10 = math.tanh %9 : vector<1x1xf32>
    %11 = arith.mulf %10, %10 : vector<1x1xf32>
    %cst_6 = arith.constant 1.000000e+00 : f32
    %12 = vector.broadcast %cst_6 : f32 to vector<1x1xf32>
    %13 = arith.subf %12, %11 : vector<1x1xf32>
    %14 = vector.broadcast %10 : vector<1x1xf32> to vector<1x32xf32>
    %15 = arith.mulf %3, %14 : vector<1x32xf32>
    %16 = arith.addf %4, %15 : vector<1x32xf32>
    %c0_7 = arith.constant 0 : index
    %c0_8 = arith.constant 0 : index
    %17 = vector.load %arg5[%c0_7, %c0_8] : memref<1x32xf32, #tpu.memory_space<vmem>>, vector<1x32xf32>
    tpu.vector_store %arg5[%c0_7, %c0_8], %16 {strides = array<i32>} : memref<1x32xf32, #tpu.memory_space<vmem>>, vector<1x32xf32>,
    %c0_9 = arith.constant 0 : index
    %c0_10 = arith.constant 0 : index
    %18 = vector.load %arg6[%c0_9, %c0_10] : memref<1x1xf32, #tpu.memory_space<vmem>>, vector<1x1xf32>
    tpu.vector_store %arg6[%c0_9, %c0_10], %13 {strides = array<i32>} : memref<1x1xf32, #tpu.memory_space<vmem>>, vector<1x1xf32>,
    %19 = vector.broadcast %1 : f32 to vector<1x1xf32>
    %20 = arith.mulf %13, %19 : vector<1x1xf32>
    %cst_11 = arith.constant 1.000000e+00 : f32
    %21 = vector.broadcast %cst_11 : f32 to vector<1x1xf32>
    %22 = arith.addf %21, %20 : vector<1x1xf32>
    %c0_12 = arith.constant 0 : index
    %c0_13 = arith.constant 0 : index
    %23 = vector.load %arg7[%c0_12, %c0_13] : memref<1x1xf32, #tpu.memory_space<vmem>>, vector<1x1xf32>
    tpu.vector_store %arg7[%c0_12, %c0_13], %22 {strides = array<i32>} : memref<1x1xf32, #tpu.memory_space<vmem>>, vector<1x1xf32>,
    return
  }
  func.func @transform_0(%arg0: i32) -> i32 {
    %c0_i32 = arith.constant 0 : i32
    %c0_i32_0 = arith.constant 0 : i32
    return %c0_i32 : i32
  }
  func.func @transform_1(%arg0: i32) -> (i32, i32) {
    %c0_i32 = arith.constant 0 : i32
    %c0_i32_0 = arith.constant 0 : i32
    %c0_i32_1 = arith.constant 0 : i32
    return %c0_i32, %c0_i32_0 : i32, i32
  }
  func.func @transform_2(%arg0: i32) -> (i32, i32) {
    %c0_i32 = arith.constant 0 : i32
    %c0_i32_0 = arith.constant 0 : i32
    %c0_i32_1 = arith.constant 0 : i32
    return %c0_i32, %c0_i32_0 : i32, i32
  }
  func.func @transform_3(%arg0: i32) -> (i32, i32) {
    %c0_i32 = arith.constant 0 : i32
    %c0_i32_0 = arith.constant 0 : i32
    return %arg0, %c0_i32 : i32, i32
  }
  func.func @transform_4(%arg0: i32) -> (i32, i32) {
    %c0_i32 = arith.constant 0 : i32
    %c0_i32_0 = arith.constant 0 : i32
    return %arg0, %c0_i32 : i32, i32
  }
  func.func @transform_5(%arg0: i32) -> (i32, i32) {
    %c0_i32 = arith.constant 0 : i32
    %c0_i32_0 = arith.constant 0 : i32
    return %arg0, %c0_i32 : i32, i32
  }
  func.func @transform_6(%arg0: i32) -> (i32, i32) {
    %c0_i32 = arith.constant 0 : i32
    %c0_i32_0 = arith.constant 0 : i32
    return %arg0, %c0_i32 : i32, i32
  }
}

</mosaic_0001>

<llo_original>
// kernel: tpu_custom_call.1
$region0: #{tpu_custom_call.1}
  #allocation0 [shape = 'u32[]', space=smem, size = 0x4, offset = 0x4, fixed_abs, tag = 'smem constant byte address 0x4 - core index']
  #allocation1 [shape = 'u32[144,128]{1,0:T(1,128)}', space=vmem, size = 0x12000, scoped, tag = 'internal scratch']
  %s0 = inlined_call_operand.hbm [shape: f32[2], index: 0, kind: input, shape index: {}]
  %s1 = inlined_call_operand.vmem [shape: f32[1,32], index: 1, kind: input, shape index: {}]
  %s2 = inlined_call_operand.vmem [shape: f32[1,32], index: 2, kind: input, shape index: {}]
  %s3 = inlined_call_operand.vmem [shape: f32[1,32], index: 3, kind: input, shape index: {}]
  %s4 = inlined_call_operand.hbm [shape: f32[1,32], index: 4, kind: output, shape index: {0}]
  %s5 = inlined_call_operand.hbm [shape: f32[1,1], index: 5, kind: output, shape index: {1}]
  %s6 = inlined_call_operand.hbm [shape: f32[1,1], index: 6, kind: output, shape index: {2}]
  %7 = xla_tuple %s4, %s5, %s6
  %s8 = sld [smem:[#allocation0]]
  $region46: #{tpu_custom_call.1} parent=0
    _
  %s10 = ssub.s32 1, %s8
  %s11 = scalar_select 0, %s10, %s8
  $region1: #{tpu_custom_call.1} parent=0
    #allocation2 [shape = 'u8[512]{0}', space=smem, size = 0x200, scoped, tag = 'input window, operand 0, single buffered']
    #allocation3 [shape = 's32[1]{0}', space=sflag, size = 0x4, scoped, tag = 'scoped memory for tpu_custom_call.1']
    #allocation4 [shape = 's32[1]{0}', space=sflag, size = 0x4, scoped, tag = 'scoped memory for tpu_custom_call.1']
    #allocation5 [shape = 'u8[512]{0}', space=vmem, size = 0x400, scoped, tag = 'output window, operand 0, single buffered']
    #allocation6 [shape = 'u8[512]{0}', space=vmem, size = 0x400, scoped, tag = 'output window, operand 1, single buffered']
    #allocation7 [shape = 's32[1]{0}', space=sflag, size = 0x4, scoped, tag = 'scoped memory for tpu_custom_call.1']
    #allocation8 [shape = 'u8[512]{0}', space=vmem, size = 0x400, scoped, tag = 'output window, operand 2, single buffered']
    %12 = vsyncpa [#allocation4], 0
    %13 = vsyncpa [#allocation3], 0
    %14 = vsyncpa [#allocation7], 0
    // Predicated region
    $region2: #{tpu_custom_call.1} parent=1 // pred_check
      _
    $region3: #{tpu_custom_call.1} parent=1 // pred_check_branch
      %16 = sbr.rel (0) target = $region5
    $region4: #{tpu_custom_call.1} parent=1 // pred_region
      %s18 = ssub.s32 16, 16
      %19 = vsyncadd [#allocation4], %s18
      %22 = dma.hbm_to_smem %s0, 16, [#allocation2], [#allocation4]
    $region5: #{tpu_custom_call.1} parent=1 // pred_fallthru
      _
    // Predicated region
    $region6: #{tpu_custom_call.1} parent=1 // pred_check
      _
    $region7: #{tpu_custom_call.1} parent=1 // pred_check_branch
      %24 = sbr.rel (0) target = $region9
    $region8: #{tpu_custom_call.1} parent=1 // pred_region
      _
    $region9: #{tpu_custom_call.1} parent=1 // pred_fallthru
      _
    // Predicated region
    $region10: #{tpu_custom_call.1} parent=1 // pred_check
      _
    $region11: #{tpu_custom_call.1} parent=1 // pred_check_branch
      %26 = sbr.rel (0) target = $region13
    $region12: #{tpu_custom_call.1} parent=1 // pred_region
      _
    $region13: #{tpu_custom_call.1} parent=1 // pred_fallthru
      _
    // Predicated region
    $region14: #{tpu_custom_call.1} parent=1 // pred_check
      _
    $region15: #{tpu_custom_call.1} parent=1 // pred_check_branch
      %28 = sbr.rel (0) target = $region17
    $region16: #{tpu_custom_call.1} parent=1 // pred_region
      _
    $region17: #{tpu_custom_call.1} parent=1 // pred_fallthru
      _
    // Predicated region
    $region18: #{tpu_custom_call.1} parent=1 // pred_check
      _
    $region19: #{tpu_custom_call.1} parent=1 // pred_check_branch
      %30 = sbr.rel (0) target = $region21
    $region20: #{tpu_custom_call.1} parent=1 // pred_region
      %31 = dma.done [#allocation4], 16
    $region21: #{tpu_custom_call.1} parent=1 // pred_fallthru
      _
    %32 = sfence
    %s33 = sld [smem:[#allocation2]]
    %s34 = sld [smem:[#allocation2 + $0x1]]
    %v35 = vld [vmem:[%s1] sm:$0x1]
    %v36 = vld [vmem:[%s2] sm:$0x1]
    %v37 = vld [vmem:[%s3] sm:$0x1]
    %v38 = vmul.f32 %v37, %v35
    %vm39 = vcmask 253952
    %v40 = vsel %vm39, %v38, 0.0
    %41 = vadd.xlane.f32.xlu0 %v40
    %v42 = vpop.xlane.xlu0 %41
    %v43 = vstv %s33
    %v44 = vadd.f32 %v42, %v43
    %v45 = vtanh.pop %v44
    %v46 = vmul.f32 %v45, %v45
    %v47 = vsub.f32 1.0, %v46
    %v48 = vmul.f32 %v36, %v45
    %v49 = vadd.f32 %v37, %v48
    %50 = vst.msk [vmem:[#allocation5] sm:$0x1] %vm39, %v49
    %vm51 = vcmask 0
    %52 = vst.msk [vmem:[#allocation6] sm:$0x1] %vm51, %v47
    %v53 = vstv %s34
    %v54 = vmul.f32 %v47, %v53
    %v55 = vadd.f32 %v54, 1.0
    %56 = vst.msk [vmem:[#allocation8] sm:$0x1] %vm51, %v55
    // Predicated region
    $region22: #{tpu_custom_call.1} parent=1 // pred_check
      _
    $region23: #{tpu_custom_call.1} parent=1 // pred_check_branch
      %58 = sbr.rel (0) target = $region25
    $region24: #{tpu_custom_call.1} parent=1 // pred_region
      %s60 = ssub.s32 16, 16
      %61 = vsyncadd [#allocation3], %s60
      %s63 = sshll.u32 [#allocation5], 4
      %s64 = int_to_ptr.vmem [resolvable:$true] %s63
      %66 = dma.vmem_to_hbm [thread:$0]  %s64, 16, %s4, [#allocation3]
    $region25: #{tpu_custom_call.1} parent=1 // pred_fallthru
      _
    // Predicated region
    $region26: #{tpu_custom_call.1} parent=1 // pred_check
      _
    $region27: #{tpu_custom_call.1} parent=1 // pred_check_branch
      %68 = sbr.rel (0) target = $region29
    $region28: #{tpu_custom_call.1} parent=1 // pred_region
      %s70 = ssub.s32 16, 16
      %71 = vsyncadd [#allocation7], %s70
      %s73 = sshll.u32 [#allocation6], 4
      %s74 = int_to_ptr.vmem [resolvable:$true] %s73
      %76 = dma.vmem_to_hbm [thread:$0]  %s74, 16, %s5, [#allocation7]
    $region29: #{tpu_custom_call.1} parent=1 // pred_fallthru
      _
    // Predicated region
    $region30: #{tpu_custom_call.1} parent=1 // pred_check
      _
    $region31: #{tpu_custom_call.1} parent=1 // pred_check_branch
      %78 = sbr.rel (0) target = $region33
    $region32: #{tpu_custom_call.1} parent=1 // pred_region
      %s80 = ssub.s32 16, 16
      %81 = vsyncadd [#allocation7], %s80
      %s83 = sshll.u32 [#allocation8], 4
      %s84 = int_to_ptr.vmem [resolvable:$true] %s83
      %86 = dma.vmem_to_hbm [thread:$0]  %s84, 16, %s6, [#allocation7]
    $region33: #{tpu_custom_call.1} parent=1 // pred_fallthru
      _
    // Predicated region
    $region34: #{tpu_custom_call.1} parent=1 // pred_check
      _
    $region35: #{tpu_custom_call.1} parent=1 // pred_check_branch
      %88 = sbr.rel (0) target = $region37
    $region36: #{tpu_custom_call.1} parent=1 // pred_region
      %89 = dma.done [#allocation3], 16
    $region37: #{tpu_custom_call.1} parent=1 // pred_fallthru
      _
    // Predicated region
    $region38: #{tpu_custom_call.1} parent=1 // pred_check
      _
    $region39: #{tpu_custom_call.1} parent=1 // pred_check_branch
      %91 = sbr.rel (0) target = $region41
    $region40: #{tpu_custom_call.1} parent=1 // pred_region
      %92 = dma.done [#allocation7], 16
    $region41: #{tpu_custom_call.1} parent=1 // pred_fallthru
      _
    // Predicated region
    $region42: #{tpu_custom_call.1} parent=1 // pred_check
      _
    $region43: #{tpu_custom_call.1} parent=1 // pred_check_branch
      %94 = sbr.rel (0) target = $region45
    $region44: #{tpu_custom_call.1} parent=1 // pred_region
      %95 = dma.done [#allocation7], 16
    $region45: #{tpu_custom_call.1} parent=1 // pred_fallthru
      _
    %96 = vsyncpa [#allocation3], 1
    %97 = vsyncpa [#allocation7], 1
    %98 = vsyncpa [#allocation4], 1

</llo_original>
